<compile_context>
chip_gen: v5e
topology: v5e:2x2
jax: 0.10.0
libtpu: 0.0.40
codegen_flags: <defaults>
</compile_context>

<pallas_src>
import jax
import jax.numpy as jnp
from jax.experimental import pallas as pl
from jax.experimental.pallas import tpu as pltpu

LANE = 128
SUBLANE = 8
MAX_TB = 256  # max batch rows per grid step


def _round_up(x, m):
    return (x + m - 1) // m * m


# ----------------------------- Pallas kernel --------------------------------
def _federal_kernel(idx_ref,   # VMEM [TB, n_cols] int32  global (offset) table row ids
                    num_ref,   # VMEM [TB, NV_pad] f32    numeric features (zero-padded)
                    tab_ref,   # VMEM [V_pad, H]   f32    stacked folded tables (E_c@W1_c, +b1 in col-0 rows)
                    w1n_ref,   # VMEM [NV_pad, H]  f32    numeric slice of W1 (rows zero-padded)
                    w2_ref,    # VMEM [H, C_pad]   f32    class dim zero-padded to 128
                    b2_ref,    # VMEM [1, C_pad]   f32    -1e30 in padded class columns
                    o_ref):    # VMEM [TB, C_pad]  f32    log-probabilities (padded)
    TB, n_cols = idx_ref.shape
    V_pad = tab_ref.shape[0]

    # --- multi-hot over the stacked vocabulary (one VPU compare+add per column) ---
    idx = idx_ref[...]
    v_iota = jax.lax.broadcasted_iota(jnp.int32, (TB, V_pad), 1)
    multi_hot = (v_iota == idx[:, 0:1]).astype(jnp.float32)
    for c in range(1, n_cols):                                   # n_cols is tiny & static
        multi_hot = multi_hot + (v_iota == idx[:, c:c + 1]).astype(jnp.float32)

    # --- linear1 (embedding half via multi-hot matmul, numeric half via small matmul) ---
    # b1 is pre-folded into the column-0 rows of tab_ref; dropout rate 0.0 -> identity.
    h = (jnp.dot(multi_hot, tab_ref[...], preferred_element_type=jnp.float32)
         + jnp.dot(num_ref[...], w1n_ref[...], preferred_element_type=jnp.float32))
    h = jnp.maximum(h, 0.0)

    # --- linear2 (lane-dense: class dim padded to 128) ------------------------
    logits = jnp.dot(h, w2_ref[...], preferred_element_type=jnp.float32) + b2_ref[...]

    # --- log_softmax over classes (padded cols carry -1e30 bias -> exp()==0) ---
    m = jnp.max(logits, axis=-1, keepdims=True)
    shifted = logits - m
    lse = jnp.log(jnp.sum(jnp.exp(shifted), axis=-1, keepdims=True))
    o_ref[...] = shifted - lse


def federal_forward(flat_idx, num_pad, folded_tab, w1_num, w2_pad, b2_pad, *, tb):
    B_pad, n_cols = flat_idx.shape
    NV_pad = num_pad.shape[1]
    V_pad, H = folded_tab.shape
    C_pad = w2_pad.shape[1]
    nb = B_pad // tb

    grid_spec = pltpu.PrefetchScalarGridSpec(
        num_scalar_prefetch=0,
        grid=(nb,),
        in_specs=[
            pl.BlockSpec((tb, n_cols), lambda i: (i, 0)),    # idx  (batch-blocked)
            pl.BlockSpec((tb, NV_pad), lambda i: (i, 0)),    # num  (batch-blocked)
            pl.BlockSpec((V_pad, H), lambda i: (0, 0)),      # weights: constant block,
            pl.BlockSpec((NV_pad, H), lambda i: (0, 0)),     # stay resident in VMEM
            pl.BlockSpec((H, C_pad), lambda i: (0, 0)),
            pl.BlockSpec((1, C_pad), lambda i: (0, 0)),
        ],
        out_specs=pl.BlockSpec((tb, C_pad), lambda i: (i, 0)),
    )

    flops = 2 * B_pad * H * (V_pad + NV_pad + C_pad) + B_pad * n_cols * V_pad
    bytes_accessed = 4 * (flat_idx.size + num_pad.size + folded_tab.size
                          + w1_num.size + w2_pad.size + b2_pad.size + B_pad * C_pad)
    cost = pl.CostEstimate(flops=int(flops),
                           transcendentals=int(B_pad * C_pad),
                           bytes_accessed=int(bytes_accessed))

    return pl.pallas_call(
        _federal_kernel,
        out_shape=jax.ShapeDtypeStruct((B_pad, C_pad), jnp.float32),
        grid_spec=grid_spec,
        compiler_params=pltpu.CompilerParams(
            dimension_semantics=("parallel",)),   # batch axis -> megacore shard on v7x
        cost_estimate=cost,
    )(flat_idx, num_pad, folded_tab, w1_num, w2_pad, b2_pad)


# --------------------------- FederalModel wrapper ----------------------------
class FederalModelPallas:
    """JAX/Pallas re-implementation of FederalModel with synthetic deterministic params."""

    def __init__(self, key, cat_vocab_sizes, num_var_number, class_number,
                 emb_dim=5, linear_size=256):
        self.cat_vocab_sizes = tuple(cat_vocab_sizes)
        self.num_var_number = num_var_number
        self.class_number = class_number
        self.emb_dim = emb_dim
        self.linear_size = linear_size

        n_cols = len(cat_vocab_sizes)
        in_dim = n_cols * emb_dim + num_var_number
        keys = jax.random.split(key, n_cols + 4)

        # --- original (PyTorch-equivalent) parameters ---
        self.emb_tables = [
            jax.random.normal(keys[i], (v, emb_dim), dtype=jnp.float32)
            for i, v in enumerate(cat_vocab_sizes)
        ]
        k1 = 1.0 / jnp.sqrt(jnp.float32(in_dim))
        self.w1 = jax.random.uniform(keys[n_cols + 0], (in_dim, linear_size),
                                     minval=-k1, maxval=k1, dtype=jnp.float32)
        self.b1 = jax.random.uniform(keys[n_cols + 1], (1, linear_size),
                                     minval=-k1, maxval=k1, dtype=jnp.float32)
        k2 = 1.0 / jnp.sqrt(jnp.float32(linear_size))
        self.w2 = jax.random.uniform(keys[n_cols + 2], (linear_size, class_number),
                                     minval=-k2, maxval=k2, dtype=jnp.float32)
        self.b2 = jax.random.uniform(keys[n_cols + 3], (1, class_number),
                                     minval=-k2, maxval=k2, dtype=jnp.float32)

        # --- kernel-side (pre-folded / padded) parameters ---
        H = linear_size
        folded, offsets, off = [], [], 0
        for c, tbl in enumerate(self.emb_tables):
            w1_slice = self.w1[c * emb_dim:(c + 1) * emb_dim, :]      # [emb_dim, H]
            f = tbl @ w1_slice                                        # [vocab_c, H]
            if c == 0:
                # fold b1: exactly one row of column 0's range is selected per example
                f = f + self.b1
            folded.append(f)
            offsets.append(off)
            off += tbl.shape[0]
        self.col_offsets = jnp.asarray(offsets, dtype=jnp.int32)      # [n_cols]
        total_vocab = off
        # lane-dense stacked table: V padded to a multiple of 128
        self.v_pad = _round_up(total_vocab, LANE)
        folded_tab = jnp.concatenate(folded, axis=0)                  # [total_vocab, H]
        self.folded_tab = jnp.pad(folded_tab, ((0, self.v_pad - total_vocab), (0, 0)))

        # numeric slice of W1, rows zero-padded to a multiple of 8 (sublane aligned)
        self.nv_pad = _round_up(max(num_var_number, 1), SUBLANE)
        w1_num = self.w1[n_cols * emb_dim:, :]                        # [num_var, H]
        self.w1_num = jnp.pad(w1_num, ((0, self.nv_pad - num_var_number), (0, 0)))

        # class dim padded to exactly 128 (lane-dense store, do not chase the 256 MXU);
        # padded bias -1e30 so exp() == 0 under log_softmax
        self.c_pad = _round_up(class_number, LANE)
        self.w2_pad = jnp.pad(self.w2, ((0, 0), (0, self.c_pad - class_number)))
        self.b2_pad = jnp.pad(self.b2, ((0, 0), (0, self.c_pad - class_number)),
                              constant_values=-1e30)

        # host-side prep (stack/offset/pad/slice) is fused with the pallas_call in one jit
        self._fwd = jax.jit(self._forward)

    def _forward(self, num_variables, *cat_variables):
        B = num_variables.shape[0]
        tb = min(MAX_TB, _round_up(B, SUBLANE))
        B_pad = _round_up(B, tb)

        # global table row ids (idx_c + column offset), stacked to [B_pad, n_cols]
        flat_idx = jnp.stack([idx.astype(jnp.int32) for idx in cat_variables], axis=1)
        flat_idx = flat_idx + self.col_offsets[None, :]
        flat_idx = jnp.pad(flat_idx, ((0, B_pad - B), (0, 0)))

        # numeric features, zero-padded to [B_pad, NV_pad]
        num_pad = jnp.pad(num_variables.astype(jnp.float32),
                          ((0, B_pad - B), (0, self.nv_pad - self.num_var_number)))

        out = federal_forward(flat_idx, num_pad, self.folded_tab, self.w1_num,
                              self.w2_pad, self.b2_pad, tb=tb)
        return out[:B, :self.class_number]

    def __call__(self, num_variables, *cat_variables):
        return self._fwd(num_variables, *cat_variables)


# ------------------------------- reference ----------------------------------
def _reference(model, num_variables, *cat_variables):
    embs = [jnp.take(tbl, idx, axis=0)
            for tbl, idx in zip(model.emb_tables, cat_variables)]
    x = jnp.concatenate(embs + [num_variables], axis=1)
    h = jnp.maximum(x @ model.w1 + model.b1, 0.0)
    logits = h @ model.w2 + model.b2
    return jax.nn.log_softmax(logits, axis=1)


if __name__ == "__main__":
    key = jax.random.PRNGKey(0)
    k_model, k_num, *k_cats = jax.random.split(key, 2 + 4)

    # Small synthetic metadata (meta.pt is not loadable; shapes consistent with the module)
    cat_vocab_sizes = (7, 5, 11, 3)   # 4 categorical columns, emb_dim=5 each
    num_var_number = 6
    class_number = 8
    batch = 8

    model = FederalModelPallas(k_model, cat_vocab_sizes, num_var_number, class_number)

    num_variables = jax.random.normal(k_num, (batch, num_var_number), dtype=jnp.float32)
    cat_variables = [
        jax.random.randint(k_cats[i], (batch,), 0, v, dtype=jnp.int32)
        for i, v in enumerate(cat_vocab_sizes)
    ]

    out = model(num_variables, *cat_variables)
    out = jax.block_until_ready(out)

    ref = _reference(model, num_variables, *cat_variables)
    assert out.shape == (batch, class_number)
    assert jnp.allclose(out, ref, atol=1e-4, rtol=1e-4), "mismatch vs reference"

    print("KERNEL_OK")
</pallas_src>

<mosaic_0001>
module attributes {stable_mosaic.version = 11 : i64} {
  func.func @_federal_kernel(%arg0: i32, %arg1: memref<8x4xi32, #tpu.memory_space<vmem>>, %arg2: memref<8x8xf32, #tpu.memory_space<vmem>>, %arg3: memref<128x256xf32, #tpu.memory_space<vmem>>, %arg4: memref<8x256xf32, #tpu.memory_space<vmem>>, %arg5: memref<256x128xf32, #tpu.memory_space<vmem>>, %arg6: memref<1x128xf32, #tpu.memory_space<vmem>>, %arg7: memref<8x128xf32, #tpu.memory_space<vmem>>) attributes {dimension_semantics = [#tpu.dimension_semantics<parallel>], iteration_bounds = array<i64: 1>, scalar_prefetch = 0 : i64, scratch_operands = 0 : i64, tpu.core_type = #tpu.core_type<tc>, window_params = [{transform_indices = @transform_0, window_bounds = array<i64: 8, 4>}, {transform_indices = @transform_1, window_bounds = array<i64: 8, 8>}, {pipeline_mode = #tpu.pipeline_mode<synchronous>, transform_indices = @transform_2, window_bounds = array<i64: 128, 256>}, {pipeline_mode = #tpu.pipeline_mode<synchronous>, transform_indices = @transform_3, window_bounds = array<i64: 8, 256>}, {pipeline_mode = #tpu.pipeline_mode<synchronous>, transform_indices = @transform_4, window_bounds = array<i64: 256, 128>}, {pipeline_mode = #tpu.pipeline_mode<synchronous>, transform_indices = @transform_5, window_bounds = array<i64: 1, 128>}, {transform_indices = @transform_6, window_bounds = array<i64: 8, 128>}]} {
    %c0 = arith.constant 0 : index
    %c0_0 = arith.constant 0 : index
    %0 = vector.load %arg1[%c0, %c0_0] : memref<8x4xi32, #tpu.memory_space<vmem>>, vector<8x4xi32>
    %1 = tpu.iota {dimensions = array<i32: 1>} : vector<8x128xi32>
    %2 = vector.extract_strided_slice %0 {offsets = [0, 0], sizes = [8, 1], strides = [1, 1]} : vector<8x4xi32> to vector<8x1xi32>
    %3 = vector.broadcast %2 : vector<8x1xi32> to vector<8x128xi32>
    %4 = arith.cmpi eq, %1, %3 : vector<8x128xi32>
    %5 = arith.extui %4 : vector<8x128xi1> to vector<8x128xi32>
    %6 = arith.sitofp %5 : vector<8x128xi32> to vector<8x128xf32>
    %7 = vector.extract_strided_slice %0 {offsets = [0, 1], sizes = [8, 1], strides = [1, 1]} : vector<8x4xi32> to vector<8x1xi32>
    %8 = vector.broadcast %7 : vector<8x1xi32> to vector<8x128xi32>
    %9 = arith.cmpi eq, %1, %8 : vector<8x128xi32>
    %10 = arith.extui %9 : vector<8x128xi1> to vector<8x128xi32>
    %11 = arith.sitofp %10 : vector<8x128xi32> to vector<8x128xf32>
    %12 = arith.addf %6, %11 : vector<8x128xf32>
    %13 = vector.extract_strided_slice %0 {offsets = [0, 2], sizes = [8, 1], strides = [1, 1]} : vector<8x4xi32> to vector<8x1xi32>
    %14 = vector.broadcast %13 : vector<8x1xi32> to vector<8x128xi32>
    %15 = arith.cmpi eq, %1, %14 : vector<8x128xi32>
    %16 = arith.extui %15 : vector<8x128xi1> to vector<8x128xi32>
    %17 = arith.sitofp %16 : vector<8x128xi32> to vector<8x128xf32>
    %18 = arith.addf %12, %17 : vector<8x128xf32>
    %19 = vector.extract_strided_slice %0 {offsets = [0, 3], sizes = [8, 1], strides = [1, 1]} : vector<8x4xi32> to vector<8x1xi32>
    %20 = vector.broadcast %19 : vector<8x1xi32> to vector<8x128xi32>
    %21 = arith.cmpi eq, %1, %20 : vector<8x128xi32>
    %22 = arith.extui %21 : vector<8x128xi1> to vector<8x128xi32>
    %23 = arith.sitofp %22 : vector<8x128xi32> to vector<8x128xf32>
    %24 = arith.addf %18, %23 : vector<8x128xf32>
    %c0_1 = arith.constant 0 : index
    %c0_2 = arith.constant 0 : index
    %25 = vector.load %arg3[%c0_1, %c0_2] : memref<128x256xf32, #tpu.memory_space<vmem>>, vector<128x256xf32>
    %cst = arith.constant dense<0.000000e+00> : vector<8x256xf32>
    %26 = tpu.matmul %24, %25, %cst {dimension_numbers = #tpu.dot_dimension_numbers<[1], [0], [0], [1], [0, 0, 1, 1], [], []>} : vector<8x128xf32>, vector<128x256xf32>, vector<8x256xf32> -> vector<8x256xf32>
    %c0_3 = arith.constant 0 : index
    %c0_4 = arith.constant 0 : index
    %27 = vector.load %arg2[%c0_3, %c0_4] : memref<8x8xf32, #tpu.memory_space<vmem>>, vector<8x8xf32>
    %c0_5 = arith.constant 0 : index
    %c0_6 = arith.constant 0 : index
    %28 = vector.load %arg4[%c0_5, %c0_6] : memref<8x256xf32, #tpu.memory_space<vmem>>, vector<8x256xf32>
    %cst_7 = arith.constant dense<0.000000e+00> : vector<8x256xf32>
    %29 = tpu.matmul %27, %28, %cst_7 {dimension_numbers = #tpu.dot_dimension_numbers<[1], [0], [0], [1], [0, 0, 1, 1], [], []>} : vector<8x8xf32>, vector<8x256xf32>, vector<8x256xf32> -> vector<8x256xf32>
    %30 = arith.addf %26, %29 : vector<8x256xf32>
    %cst_8 = arith.constant 0.000000e+00 : f32
    %31 = vector.broadcast %cst_8 : f32 to vector<8x256xf32>
    %32 = arith.maximumf %30, %31 : vector<8x256xf32>
    %c0_9 = arith.constant 0 : index
    %c0_10 = arith.constant 0 : index
    %33 = vector.load %arg5[%c0_9, %c0_10] : memref<256x128xf32, #tpu.memory_space<vmem>>, vector<256x128xf32>
    %cst_11 = arith.constant dense<0.000000e+00> : vector<8x128xf32>
    %34 = tpu.matmul %32, %33, %cst_11 {dimension_numbers = #tpu.dot_dimension_numbers<[1], [0], [0], [1], [0, 0, 1, 1], [], []>} : vector<8x256xf32>, vector<256x128xf32>, vector<8x128xf32> -> vector<8x128xf32>
    %c0_12 = arith.constant 0 : index
    %c0_13 = arith.constant 0 : index
    %35 = vector.load %arg6[%c0_12, %c0_13] : memref<1x128xf32, #tpu.memory_space<vmem>>, vector<1x128xf32>
    %36 = vector.broadcast %35 : vector<1x128xf32> to vector<8x128xf32>
    %37 = arith.addf %34, %36 : vector<8x128xf32>
    %cst_14 = arith.constant dense<0xFF800000> : vector<8xf32>
    %38 = vector.multi_reduction <maximumf>, %37, %cst_14 [1] : vector<8x128xf32> to vector<8xf32>
    %39 = vector.shape_cast %38 : vector<8xf32> to vector<8x1xf32>
    %40 = vector.broadcast %39 : vector<8x1xf32> to vector<8x128xf32>
    %41 = arith.subf %37, %40 : vector<8x128xf32>
    %42 = math.exp %41 : vector<8x128xf32>
    %cst_15 = arith.constant dense<0.000000e+00> : vector<8xf32>
    %43 = vector.multi_reduction <add>, %42, %cst_15 [1] : vector<8x128xf32> to vector<8xf32>
    %44 = vector.shape_cast %43 : vector<8xf32> to vector<8x1xf32>
    %45 = math.log %44 : vector<8x1xf32>
    %46 = vector.broadcast %45 : vector<8x1xf32> to vector<8x128xf32>
    %47 = arith.subf %41, %46 : vector<8x128xf32>
    %c0_16 = arith.constant 0 : index
    %c0_17 = arith.constant 0 : index
    %48 = vector.load %arg7[%c0_16, %c0_17] : memref<8x128xf32, #tpu.memory_space<vmem>>, vector<8x128xf32>
    tpu.vector_store %arg7[%c0_16, %c0_17], %47 {strides = array<i32>} : memref<8x128xf32, #tpu.memory_space<vmem>>, vector<8x128xf32>,
    return
  }
  func.func @transform_0(%arg0: i32) -> (i32, i32) {
    %c0_i32 = arith.constant 0 : i32
    %c0_i32_0 = arith.constant 0 : i32
    return %arg0, %c0_i32 : i32, i32
  }
  func.func @transform_1(%arg0: i32) -> (i32, i32) {
    %c0_i32 = arith.constant 0 : i32
    %c0_i32_0 = arith.constant 0 : i32
    return %arg0, %c0_i32 : i32, i32
  }
  func.func @transform_2(%arg0: i32) -> (i32, i32) {
    %c0_i32 = arith.constant 0 : i32
    %c0_i32_0 = arith.constant 0 : i32
    %c0_i32_1 = arith.constant 0 : i32
    return %c0_i32, %c0_i32_0 : i32, i32
  }
  func.func @transform_3(%arg0: i32) -> (i32, i32) {
    %c0_i32 = arith.constant 0 : i32
    %c0_i32_0 = arith.constant 0 : i32
    %c0_i32_1 = arith.constant 0 : i32
    return %c0_i32, %c0_i32_0 : i32, i32
  }
  func.func @transform_4(%arg0: i32) -> (i32, i32) {
    %c0_i32 = arith.constant 0 : i32
    %c0_i32_0 = arith.constant 0 : i32
    %c0_i32_1 = arith.constant 0 : i32
    return %c0_i32, %c0_i32_0 : i32, i32
  }
  func.func @transform_5(%arg0: i32) -> (i32, i32) {
    %c0_i32 = arith.constant 0 : i32
    %c0_i32_0 = arith.constant 0 : i32
    %c0_i32_1 = arith.constant 0 : i32
    return %c0_i32, %c0_i32_0 : i32, i32
  }
  func.func @transform_6(%arg0: i32) -> (i32, i32) {
    %c0_i32 = arith.constant 0 : i32
    %c0_i32_0 = arith.constant 0 : i32
    return %arg0, %c0_i32 : i32, i32
  }
}

</mosaic_0001>

<llo_original>
// kernel: _forward.1
$region0: #{_forward.1}
  #allocation0 [shape = 'u32[]', space=smem, size = 0x4, offset = 0x4, fixed_abs, tag = 'smem constant byte address 0x4 - core index']
  #allocation1 [shape = 'u32[72,128]{1,0:T(1,128)}', space=vmem, size = 0x9000, scoped, tag = 'internal scratch']
  %s0 = inlined_call_operand.vmem [shape: s32[8,4], index: 0, kind: input, shape index: {}]
  %s1 = inlined_call_operand.vmem [shape: f32[8,8], index: 1, kind: input, shape index: {}]
  %s2 = inlined_call_operand.hbm [shape: f32[128,256], index: 2, kind: input, shape index: {}]
  %s3 = inlined_call_operand.vmem [shape: f32[8,256], index: 3, kind: input, shape index: {}]
  %s4 = inlined_call_operand.hbm [shape: f32[256,128], index: 4, kind: input, shape index: {}]
  %s5 = inlined_call_operand.vmem [shape: f32[1,128], index: 5, kind: input, shape index: {}]
  %s6 = inlined_call_operand.hbm [shape: f32[8,128], index: 6, kind: output, shape index: {}]
  %s7 = sld [smem:[#allocation0]]
  $region42: #{_forward.1} parent=0
    _
  %s9 = ssub.s32 1, %s7
  %s10 = scalar_select 0, %s9, %s7
  $region1: #{_forward.1} parent=0
    #allocation2 [shape = 'u8[131072]{0}', space=vmem, size = 0x20000, scoped, tag = 'input window, operand 2, single buffered']
    #allocation3 [shape = 's32[1]{0}', space=sflag, size = 0x4, scoped, tag = 'scoped memory for _forward.1']
    #allocation4 [shape = 's32[1]{0}', space=sflag, size = 0x4, scoped, tag = 'scoped memory for _forward.1']
    #allocation5 [shape = 'u8[131072]{0}', space=vmem, size = 0x20000, scoped, tag = 'input window, operand 4, single buffered']
    #allocation6 [shape = 's32[1]{0}', space=sflag, size = 0x4, scoped, tag = 'scoped memory for _forward.1']
    #allocation7 [shape = 'u8[4096]{0}', space=vmem, size = 0x1000, scoped, tag = 'output window, operand 0, single buffered']
    %11 = vsyncpa [#allocation3], 0
    %12 = vsyncpa [#allocation6], 0
    %13 = vsyncpa [#allocation4], 0
    // Predicated region
    $region2: #{_forward.1} parent=1 // pred_check
      _
    $region3: #{_forward.1} parent=1 // pred_check_branch
      %15 = sbr.rel (0) target = $region5
    $region4: #{_forward.1} parent=1 // pred_region
      _
    $region5: #{_forward.1} parent=1 // pred_fallthru
      _
    // Predicated region
    $region6: #{_forward.1} parent=1 // pred_check
      _
    $region7: #{_forward.1} parent=1 // pred_check_branch
      %17 = sbr.rel (0) target = $region9
    $region8: #{_forward.1} parent=1 // pred_region
      _
    $region9: #{_forward.1} parent=1 // pred_fallthru
      _
    // Predicated region
    $region10: #{_forward.1} parent=1 // pred_check
      _
    $region11: #{_forward.1} parent=1 // pred_check_branch
      %19 = sbr.rel (0) target = $region13
    $region12: #{_forward.1} parent=1 // pred_region
      %21 = vsyncadd [#allocation3], 0
      %s22 = sshll.u32 %s2, 4
      %s23 = int_to_ptr.hbm [resolvable:$true] %s22
      %s24 = sshll.u32 [#allocation2], 4
      %s25 = int_to_ptr.vmem [resolvable:$true] %s24
      %30 = dma.hbm_to_vmem [thread:$0]  %s23, 4096, %s25, [#allocation3], 256, 256, 16
    $region13: #{_forward.1} parent=1 // pred_fallthru
      _
    // Predicated region
    $region14: #{_forward.1} parent=1 // pred_check
      _
    $region15: #{_forward.1} parent=1 // pred_check_branch
      %32 = sbr.rel (0) target = $region17
    $region16: #{_forward.1} parent=1 // pred_region
      _
    $region17: #{_forward.1} parent=1 // pred_fallthru
      _
    // Predicated region
    $region18: #{_forward.1} parent=1 // pred_check
      _
    $region19: #{_forward.1} parent=1 // pred_check_branch
      %34 = sbr.rel (0) target = $region21
    $region20: #{_forward.1} parent=1 // pred_region
      %36 = vsyncadd [#allocation6], 0
      %s37 = sshll.u32 %s4, 4
      %s38 = int_to_ptr.hbm [resolvable:$true] %s37
      %s39 = sshll.u32 [#allocation5], 4
      %s40 = int_to_ptr.vmem [resolvable:$true] %s39
      %45 = dma.hbm_to_vmem [thread:$0]  %s38, 4096, %s40, [#allocation6], 128, 128, 8
    $region21: #{_forward.1} parent=1 // pred_fallthru
      _
    // Predicated region
    $region22: #{_forward.1} parent=1 // pred_check
      _
    $region23: #{_forward.1} parent=1 // pred_check_branch
      %47 = sbr.rel (0) target = $region25
    $region24: #{_forward.1} parent=1 // pred_region
      _
    $region25: #{_forward.1} parent=1 // pred_fallthru
      _
    // Predicated region
    $region26: #{_forward.1} parent=1 // pred_check
      _
    $region27: #{_forward.1} parent=1 // pred_check_branch
      %49 = sbr.rel (0) target = $region29
    $region28: #{_forward.1} parent=1 // pred_region
      %51 = dma.done [#allocation3], 4096
    $region29: #{_forward.1} parent=1 // pred_fallthru
      _
    // Predicated region
    $region30: #{_forward.1} parent=1 // pred_check
      _
    $region31: #{_forward.1} parent=1 // pred_check_branch
      %53 = sbr.rel (0) target = $region33
    $region32: #{_forward.1} parent=1 // pred_region
      %55 = dma.done [#allocation6], 4096
    $region33: #{_forward.1} parent=1 // pred_fallthru
      _
    %v56 = vld [vmem:[%s0] sm:$0xff]
    %v57 = vlaneseq
    %v58 = vand.u32 %v57, 127
    %59 = vset.pattern.permute.xlu0 0
    %60 = vperm.xlu0 %59, %v56
    %v61 = vpop.permute.xlu0 %60
    %vm62 = vcmp.eq.s32.totalorder %v58, %v61
    %v63 = vsel %vm62, 1, 0
    %v64 = vcvt.s32.f32 %v63
    %65 = vset.pattern.permute.xlu0 1
    %66 = vperm.xlu0 %65, %v56
    %v67 = vpop.permute.xlu0 %66
    %vm68 = vcmp.eq.s32.totalorder %v58, %v67
    %v69 = vsel %vm68, 1, 0
    %v70 = vcvt.s32.f32 %v69
    %v71 = vadd.f32 %v64, %v70
    %72 = vset.pattern.permute.xlu0 2
    %73 = vperm.xlu0 %72, %v56
    %v74 = vpop.permute.xlu0 %73
    %vm75 = vcmp.eq.s32.totalorder %v58, %v74
    %v76 = vsel %vm75, 1, 0
    %v77 = vcvt.s32.f32 %v76
    %v78 = vadd.f32 %v71, %v77
    %79 = vset.pattern.permute.xlu0 3
    %80 = vperm.xlu0 %79, %v56
    %v81 = vpop.permute.xlu0 %80
    %vm82 = vcmp.eq.s32.totalorder %v58, %v81
    %v83 = vsel %vm82, 1, 0
    %v84 = vcvt.s32.f32 %v83
    %v85 = vadd.f32 %v78, %v84
    %v86 = vld [vmem:[#allocation2] sm:$0xff]
    %v87 = vld [vmem:[#allocation2 + $0x8] sm:$0xff]
    %v88 = vld [vmem:[#allocation2 + $0x10] sm:$0xff]
    %v89 = vld [vmem:[#allocation2 + $0x18] sm:$0xff]
    %v90 = vld [vmem:[#allocation2 + $0x20] sm:$0xff]
    %v91 = vld [vmem:[#allocation2 + $0x28] sm:$0xff]
    %v92 = vld [vmem:[#allocation2 + $0x30] sm:$0xff]
    %v93 = vld [vmem:[#allocation2 + $0x38] sm:$0xff]
    %v94 = vld [vmem:[#allocation2 + $0x40] sm:$0xff]
    %v95 = vld [vmem:[#allocation2 + $0x48] sm:$0xff]
    %v96 = vld [vmem:[#allocation2 + $0x50] sm:$0xff]
    %v97 = vld [vmem:[#allocation2 + $0x58] sm:$0xff]
    %v98 = vld [vmem:[#allocation2 + $0x60] sm:$0xff]
    %v99 = vld [vmem:[#allocation2 + $0x68] sm:$0xff]
    %v100 = vld [vmem:[#allocation2 + $0x70] sm:$0xff]
    %v101 = vld [vmem:[#allocation2 + $0x78] sm:$0xff]
    %v102 = vld [vmem:[#allocation2 + $0x80] sm:$0xff]
    %v103 = vld [vmem:[#allocation2 + $0x88] sm:$0xff]
    %v104 = vld [vmem:[#allocation2 + $0x90] sm:$0xff]
    %v105 = vld [vmem:[#allocation2 + $0x98] sm:$0xff]
    %v106 = vld [vmem:[#allocation2 + $0xa0] sm:$0xff]
    %v107 = vld [vmem:[#allocation2 + $0xa8] sm:$0xff]
    %v108 = vld [vmem:[#allocation2 + $0xb0] sm:$0xff]
    %v109 = vld [vmem:[#allocation2 + $0xb8] sm:$0xff]
    %v110 = vld [vmem:[#allocation2 + $0xc0] sm:$0xff]
    %v111 = vld [vmem:[#allocation2 + $0xc8] sm:$0xff]
    %v112 = vld [vmem:[#allocation2 + $0xd0] sm:$0xff]
    %v113 = vld [vmem:[#allocation2 + $0xd8] sm:$0xff]
    %v114 = vld [vmem:[#allocation2 + $0xe0] sm:$0xff]
    %v115 = vld [vmem:[#allocation2 + $0xe8] sm:$0xff]
    %v116 = vld [vmem:[#allocation2 + $0xf0] sm:$0xff]
    %v117 = vld [vmem:[#allocation2 + $0xf8] sm:$0xff]
    %v118 = vld [vmem:[%s1] sm:$0xff]
    %v119 = vld [vmem:[%s3] sm:$0xff]
    %v120 = vld [vmem:[%s3 + $0x8] sm:$0xff]
    %vm121 = vcmask 64512
    %v123 = vsel %vm121, %v118, 0
    %125 = vmatpush.msra.mxu0 0.0
    %126 = vmatpush.msra.mxu0 0.0
    %127 = vmatpush.msra.mxu0 0.0
    %128 = vmatpush.msra.mxu0 0.0
    %129 = vmatpush.msra.mxu0 0.0
    %130 = vmatpush.msra.mxu0 0.0
    %131 = vmatpush.msra.mxu0 0.0
    %132 = vmatpush.msra.mxu0 0.0
    %133 = vmatpush.msra.mxu0 0.0
    %134 = vmatpush.msra.mxu0 0.0
    %135 = vmatpush.msra.mxu0 0.0
    %136 = vmatpush.msra.mxu0 0.0
    %137 = vmatpush.msra.mxu0 0.0
    %138 = vmatpush.msra.mxu0 0.0
    %139 = vmatpush.msra.mxu0 0.0
    %140 = vmatpush.msra.mxu0 %v119
    %141 = vmatmul.f32.gmra.mxu0 %v123
    %v142 = vpop.f32.mrf.mxu0
    %v143 = vadd.f32 0.0, %v142
    %144 = vdwg.mxu0
    %145 = vmatpush.msra.mxu0 0.0
    %146 = vmatpush.msra.mxu0 0.0
    %147 = vmatpush.msra.mxu0 0.0
    %148 = vmatpush.msra.mxu0 0.0
    %149 = vmatpush.msra.mxu0 0.0
    %150 = vmatpush.msra.mxu0 0.0
    %151 = vmatpush.msra.mxu0 0.0
    %152 = vmatpush.msra.mxu0 0.0
    %153 = vmatpush.msra.mxu0 0.0
    %154 = vmatpush.msra.mxu0 0.0
    %155 = vmatpush.msra.mxu0 0.0
    %156 = vmatpush.msra.mxu0 0.0
    %157 = vmatpush.msra.mxu0 0.0
    %158 = vmatpush.msra.mxu0 0.0
    %159 = vmatpush.msra.mxu0 0.0
    %160 = vmatpush.msra.mxu0 %v120
    %161 = vmatmul.f32.gmra.mxu0 %v123
    %v162 = vpop.f32.mrf.mxu0
    %v163 = vadd.f32 0.0, %v162
    %164 = vdwg.mxu0
    %165 = vmatpush.msra.mxu0 %v116
    %166 = vmatpush.msra.mxu0 %v114
    %167 = vmatpush.msra.mxu0 %v112
    %168 = vmatpush.msra.mxu0 %v110
    %169 = vmatpush.msra.mxu0 %v108
    %170 = vmatpush.msra.mxu0 %v106
    %171 = vmatpush.msra.mxu0 %v104
    %172 = vmatpush.msra.mxu0 %v102
    %173 = vmatpush.msra.mxu0 %v100
    %174 = vmatpush.msra.mxu0 %v98
    %175 = vmatpush.msra.mxu0 %v96
    %176 = vmatpush.msra.mxu0 %v94
    %177 = vmatpush.msra.mxu0 %v92
    %178 = vmatpush.msra.mxu0 %v90
    %179 = vmatpush.msra.mxu0 %v88
    %180 = vmatpush.msra.mxu0 %v86
    %181 = vmatmul.f32.gmra.mxu0 %v85
    %v182 = vpop.f32.mrf.mxu0
    %v183 = vadd.f32 %v143, %v182
    %184 = vdwg.mxu0
    %185 = vmatpush.msra.mxu0 %v117
    %186 = vmatpush.msra.mxu0 %v115
    %187 = vmatpush.msra.mxu0 %v113
    %188 = vmatpush.msra.mxu0 %v111
    %189 = vmatpush.msra.mxu0 %v109
    %190 = vmatpush.msra.mxu0 %v107
    %191 = vmatpush.msra.mxu0 %v105
    %192 = vmatpush.msra.mxu0 %v103
    %193 = vmatpush.msra.mxu0 %v101
    %194 = vmatpush.msra.mxu0 %v99
    %195 = vmatpush.msra.mxu0 %v97
    %196 = vmatpush.msra.mxu0 %v95
    %197 = vmatpush.msra.mxu0 %v93
    %198 = vmatpush.msra.mxu0 %v91
    %199 = vmatpush.msra.mxu0 %v89
    %200 = vmatpush.msra.mxu0 %v87
    %201 = vmatmul.f32.gmra.mxu0 %v85
    %v202 = vpop.f32.mrf.mxu0
    %v203 = vadd.f32 %v163, %v202
    %204 = vdwg.mxu0
    %v205 = vmax.f32 %v183, 0.0
    %v206 = vmax.f32 %v203, 0.0
    %v207 = vld [vmem:[#allocation5] sm:$0xff]
    %v208 = vld [vmem:[#allocation5 + $0x8] sm:$0xff]
    %v209 = vld [vmem:[#allocation5 + $0x10] sm:$0xff]
    %v210 = vld [vmem:[#allocation5 + $0x18] sm:$0xff]
    %v211 = vld [vmem:[#allocation5 + $0x20] sm:$0xff]
    %v212 = vld [vmem:[#allocation5 + $0x28] sm:$0xff]
    %v213 = vld [vmem:[#allocation5 + $0x30] sm:$0xff]
    %v214 = vld [vmem:[#allocation5 + $0x38] sm:$0xff]
    %v215 = vld [vmem:[#allocation5 + $0x40] sm:$0xff]
    %v216 = vld [vmem:[#allocation5 + $0x48] sm:$0xff]
    %v217 = vld [vmem:[#allocation5 + $0x50] sm:$0xff]
    %v218 = vld [vmem:[#allocation5 + $0x58] sm:$0xff]
    %v219 = vld [vmem:[#allocation5 + $0x60] sm:$0xff]
    %v220 = vld [vmem:[#allocation5 + $0x68] sm:$0xff]
    %v221 = vld [vmem:[#allocation5 + $0x70] sm:$0xff]
    %v222 = vld [vmem:[#allocation5 + $0x78] sm:$0xff]
    %v223 = vld [vmem:[#allocation5 + $0x80] sm:$0xff]
    %v224 = vld [vmem:[#allocation5 + $0x88] sm:$0xff]
    %v225 = vld [vmem:[#allocation5 + $0x90] sm:$0xff]
    %v226 = vld [vmem:[#allocation5 + $0x98] sm:$0xff]
    %v227 = vld [vmem:[#allocation5 + $0xa0] sm:$0xff]
    %v228 = vld [vmem:[#allocation5 + $0xa8] sm:$0xff]
    %v229 = vld [vmem:[#allocation5 + $0xb0] sm:$0xff]
    %v230 = vld [vmem:[#allocation5 + $0xb8] sm:$0xff]
    %v231 = vld [vmem:[#allocation5 + $0xc0] sm:$0xff]
    %v232 = vld [vmem:[#allocation5 + $0xc8] sm:$0xff]
    %v233 = vld [vmem:[#allocation5 + $0xd0] sm:$0xff]
    %v234 = vld [vmem:[#allocation5 + $0xd8] sm:$0xff]
    %v235 = vld [vmem:[#allocation5 + $0xe0] sm:$0xff]
    %v236 = vld [vmem:[#allocation5 + $0xe8] sm:$0xff]
    %v237 = vld [vmem:[#allocation5 + $0xf0] sm:$0xff]
    %v238 = vld [vmem:[#allocation5 + $0xf8] sm:$0xff]
    %v239 = vld [vmem:[%s5] sm:$0x1]
    %v241 = vperm.slane %v239, 0
    %243 = vmatpush.msra.mxu0 %v222
    %244 = vmatpush.msra.mxu0 %v221
    %245 = vmatpush.msra.mxu0 %v220
    %246 = vmatpush.msra.mxu0 %v219
    %247 = vmatpush.msra.mxu0 %v218
    %248 = vmatpush.msra.mxu0 %v217
    %249 = vmatpush.msra.mxu0 %v216
    %250 = vmatpush.msra.mxu0 %v215
    %251 = vmatpush.msra.mxu0 %v214
    %252 = vmatpush.msra.mxu0 %v213
    %253 = vmatpush.msra.mxu0 %v212
    %254 = vmatpush.msra.mxu0 %v211
    %255 = vmatpush.msra.mxu0 %v210
    %256 = vmatpush.msra.mxu0 %v209
    %257 = vmatpush.msra.mxu0 %v208
    %258 = vmatpush.msra.mxu0 %v207
    %259 = vmatmul.f32.gmra.mxu0 %v205
    %v260 = vpop.f32.mrf.mxu0
    %v261 = vadd.f32 %v241, %v260
    %262 = vdwg.mxu0
    %263 = vmatpush.msra.mxu0 %v238
    %264 = vmatpush.msra.mxu0 %v237
    %265 = vmatpush.msra.mxu0 %v236
    %266 = vmatpush.msra.mxu0 %v235
    %267 = vmatpush.msra.mxu0 %v234
    %268 = vmatpush.msra.mxu0 %v233
    %269 = vmatpush.msra.mxu0 %v232
    %270 = vmatpush.msra.mxu0 %v231
    %271 = vmatpush.msra.mxu0 %v230
    %272 = vmatpush.msra.mxu0 %v229
    %273 = vmatpush.msra.mxu0 %v228
    %274 = vmatpush.msra.mxu0 %v227
    %275 = vmatpush.msra.mxu0 %v226
    %276 = vmatpush.msra.mxu0 %v225
    %277 = vmatpush.msra.mxu0 %v224
    %278 = vmatpush.msra.mxu0 %v223
    %279 = vmatmul.f32.gmra.mxu0 %v206
    %v280 = vpop.f32.mrf.mxu0
    %v281 = vadd.f32 %v261, %v280
    %282 = vdwg.mxu0
    %283 = vmax.xlane.f32.xlu0 %v281
    %v284 = vpop.xlane.xlu0 %283
    %v285 = vsub.f32 %v281, %v284
    %v286 = vmul.f32 %v285, 1.442695
    %v287 = vpow.pop %v286
    %288 = vadd.xlane.f32.xlu0 %v287
    %v289 = vpop.xlane.xlu0 %288
    %v290 = vlog2.pop %v289
    %v291 = vmul.f32 %v290, 0.6931472
    %v292 = vsub.f32 %v285, %v291
    %293 = vst [vmem:[#allocation7] sm:$0xff] %v292
    // Predicated region
    $region34: #{_forward.1} parent=1 // pred_check
      _
    $region35: #{_forward.1} parent=1 // pred_check_branch
      %295 = sbr.rel (0) target = $region37
    $region36: #{_forward.1} parent=1 // pred_region
      %297 = vsyncadd [#allocation4], 0
      %s299 = sshll.u32 [#allocation7], 4
      %s300 = int_to_ptr.vmem [resolvable:$true] %s299
      %s301 = sshll.u32 %s6, 4
      %s302 = int_to_ptr.hbm [resolvable:$true] %s301
      %304 = dma.vmem_to_hbm [thread:$0]  %s300, 128, %s302, [#allocation4]
    $region37: #{_forward.1} parent=1 // pred_fallthru
      _
    // Predicated region
    $region38: #{_forward.1} parent=1 // pred_check
      _
    $region39: #{_forward.1} parent=1 // pred_check_branch
      %306 = sbr.rel (0) target = $region41
    $region40: #{_forward.1} parent=1 // pred_region
      %308 = dma.done [#allocation4], 128
    $region41: #{_forward.1} parent=1 // pred_fallthru
      _
    %309 = vsyncpa [#allocation3], 1
    %310 = vsyncpa [#allocation6], 1
    %311 = vsyncpa [#allocation4], 1

</llo_original>
